<compile_context>
chip_gen: v7x
topology: tpu7x:2x2x1
jax: 0.10.0
libtpu: 0.0.40
codegen_flags: <defaults>
</compile_context>

<pallas_src>
import functools
import math

import jax
import jax.numpy as jnp
from jax.experimental import pallas as pl
from jax.experimental.pallas import tpu as pltpu

_LANES = 128


# --------------------------------------------------------------------------
# Hardware queries / heuristics
# --------------------------------------------------------------------------
def _device_kind():
    try:
        return jax.devices()[0].device_kind.lower()
    except Exception:
        return ""


def _vmem_capacity_bytes():
    """Per-core VMEM; generation-aware fallback if the query fails."""
    try:
        cap = getattr(pltpu.get_tpu_info(), "vmem_capacity_bytes", None)
        if cap:
            return int(cap)
    except Exception:
        pass
    kind = _device_kind()
    if "7" in kind:                       # v7x: 64 MiB per TensorCore
        return 64 * 1024 * 1024
    if "v5" in kind or "v6" in kind:      # v5e / v5p / v6e: 128 MiB
        return 128 * 1024 * 1024
    return 64 * 1024 * 1024               # conservative default


def _num_tensorcores():
    """TensorCores per chip (v7x has 2, earlier gens 1)."""
    return 2 if "7" in _device_kind() else 1


def _sublane_multiple(itemsize):
    if itemsize >= 4:
        return 8
    if itemsize == 2:
        return 16
    return 32


def _round_up(x, m):
    return ((x + m - 1) // m) * m


def _per_row_bytes(width, itemsize):
    # 2 in + 2 out double-buffered pipeline copies at native itemsize, plus
    # ~2 f32-wide intermediates (x*x, broadcast inv) live inside the body.
    return 4 * width * itemsize + 8 * width


def _pick_block_rows(rows, width, itemsize, budget, sub, num_tc):
    """Largest row tile (multiple of `sub`) whose pipeline footprint fits."""
    per_row = _per_row_bytes(width, itemsize)
    br = max(sub, (budget // max(per_row, 1)) // sub * sub)
    # >=2 grid steps for read/compute/write overlap (single-TC chips).
    if rows > 2 * sub:
        br = min(br, _round_up(-(-rows // 2), sub))
    # On dual-TC (v7x) make the step count even so the "parallel" axis
    # splits evenly across both TensorCores.
    steps = -(-rows // br)
    if num_tc >= 2 and rows > sub and steps % 2 != 0:
        steps = steps + 1 if steps > 1 else 2
        br = max(sub, _round_up(-(-rows // steps), sub))
    return int(min(br, _round_up(rows, sub)))


def _vmem_limit(per_row, block_rows, cap, extra=0):
    footprint = per_row * block_rows + extra
    return int(min(int(0.9 * cap), max(2 * footprint + (8 << 20), 32 << 20)))


def _fold_group(hidden, rows):
    """Smallest g with (g*hidden) % 128 == 0 and rows % g == 0 (small hidden)."""
    if hidden >= _LANES:
        return None
    g = _LANES // math.gcd(hidden, _LANES)
    if g <= 1 or g > 32:          # cap MXU cost at 2*g <= 64 MACs / element
        return None
    if rows % g != 0:
        return None
    return g


# --------------------------------------------------------------------------
# Kernels
# --------------------------------------------------------------------------
def _norm_kernel(x_ref, o_ref, *, eps):
    # TODO(synk): torch.isfinite(x).all() runtime asserts have no clean
    # production-mode Pallas equivalent (pl.debug_check only fires under
    # pl.enable_debug_checks()); skipped.
    xf = x_ref[...].astype(jnp.float32)
    # Within-row reduce only: OOB garbage rows of a partial block stay in
    # their own (dropped) output rows.
    ssq = jnp.sum(xf * xf, axis=-1, keepdims=True)
    inv = pl.reciprocal(jnp.sqrt(ssq) + eps, approx=False)
    o_ref[...] = (xf * inv).astype(o_ref.dtype)


def _norm_folded_kernel(x_ref, narrow_ref, expand_ref, o_ref, *, eps):
    # Each VMEM row holds g original rows folded into the lane dim. The
    # segmented sum of squares / broadcast use two narrow matmuls with
    # constant matrices hoisted to the wrapper (VMEM-resident across steps).
    # Matmul rows are independent, so OOB garbage rows do not contaminate
    # valid rows and are dropped on writeback.
    xf = x_ref[...].astype(jnp.float32)                      # [br, width]
    ssq_small = jnp.dot(xf * xf, narrow_ref[...],
                        preferred_element_type=jnp.float32)  # [br, g]
    inv_small = pl.reciprocal(jnp.sqrt(ssq_small) + eps, approx=False)
    inv = jnp.dot(inv_small, expand_ref[...],
                  preferred_element_type=jnp.float32)        # [br, width]
    o_ref[...] = (xf * inv).astype(o_ref.dtype)


def _ssq_accum_kernel(x_ref, ssq_ref, *, width, block_w):
    # Pass 1 of the width-tiled path: accumulate sum-of-squares over width
    # blocks (grid axis 1, "arbitrary", iterated fastest).
    @pl.when(pl.program_id(1) == 0)
    def _():
        ssq_ref[...] = jnp.zeros_like(ssq_ref)

    xf = x_ref[...].astype(jnp.float32)
    if width % block_w:
        # Mask OOB lanes of the partial last width block (would otherwise
        # corrupt the reduction with garbage).
        col = jax.lax.broadcasted_iota(jnp.int32, xf.shape, 1)
        xf = jnp.where(pl.program_id(1) * block_w + col < width, xf, 0.0)
    ssq_ref[...] += jnp.sum(xf * xf, axis=-1, keepdims=True)


def _scale_kernel(x_ref, ssq_ref, o_ref, *, eps):
    inv = pl.reciprocal(jnp.sqrt(ssq_ref[...]) + eps, approx=False)
    o_ref[...] = (x_ref[...].astype(jnp.float32) * inv).astype(o_ref.dtype)


# --------------------------------------------------------------------------
# Wrappers
# --------------------------------------------------------------------------
def _norm_wide(x2, eps, rows, width, itemsize, sub, budget, cap, num_tc,
               block_rows, block_w):
    """Two-pass width-tiled path for very large hidden (v7x 64 MiB guard)."""
    if block_w is None:
        block_w = min(_round_up(width, _LANES), 2048)
        while block_w > _LANES and sub * _per_row_bytes(block_w, itemsize) > budget:
            block_w //= 2
        block_w = max(_LANES, (block_w // _LANES) * _LANES)
    else:
        block_w = max(_LANES, (int(block_w) // _LANES) * _LANES)
        block_w = min(block_w, _round_up(width, _LANES))

    per_row = _per_row_bytes(block_w, itemsize)
    if block_rows is None:
        block_rows = _pick_block_rows(rows, block_w, itemsize, budget, sub, num_tc)
    vmem_limit = _vmem_limit(per_row, block_rows, cap)
    gr = pl.cdiv(rows, block_rows)
    gw = pl.cdiv(width, block_w)

    ssq = pl.pallas_call(
        functools.partial(_ssq_accum_kernel, width=width, block_w=block_w),
        out_shape=jax.ShapeDtypeStruct((rows, 1), jnp.float32),
        grid_spec=pltpu.PrefetchScalarGridSpec(
            num_scalar_prefetch=0,
            grid=(gr, gw),
            in_specs=[pl.BlockSpec((block_rows, block_w), lambda i, j: (i, j))],
            out_specs=pl.BlockSpec((block_rows, 1), lambda i, j: (i, 0)),
        ),
        compiler_params=pltpu.CompilerParams(
            dimension_semantics=("parallel", "arbitrary"),
            vmem_limit_bytes=vmem_limit),
    )(x2)

    return pl.pallas_call(
        functools.partial(_scale_kernel, eps=eps),
        out_shape=jax.ShapeDtypeStruct((rows, width), x2.dtype),
        grid_spec=pltpu.PrefetchScalarGridSpec(
            num_scalar_prefetch=0,
            grid=(gr, gw),
            in_specs=[pl.BlockSpec((block_rows, block_w), lambda i, j: (i, j)),
                      pl.BlockSpec((block_rows, 1), lambda i, j: (i, 0))],
            out_specs=pl.BlockSpec((block_rows, block_w), lambda i, j: (i, j)),
        ),
        compiler_params=pltpu.CompilerParams(
            dimension_semantics=("parallel", "parallel"),
            vmem_limit_bytes=vmem_limit),
    )(x2, ssq)


def norm(x, eps=1e-4, block_rows=None, block_width=None):
    """L2-normalize x along its last dim:  x / (||x||_2 + eps)."""
    orig_shape = x.shape
    hidden = int(orig_shape[-1])
    rows = 1
    for d in orig_shape[:-1]:
        rows *= int(d)
    if rows == 0 or hidden == 0:
        return x

    itemsize = jnp.dtype(x.dtype).itemsize
    sub = _sublane_multiple(itemsize)
    cap = _vmem_capacity_bytes()
    budget = (2 * cap) // 5                      # ~40% of VMEM for the pipeline
    num_tc = _num_tensorcores()

    # ---- Folded path (small hidden): full-lane loads/stores ----------------
    g = None if block_width is not None else _fold_group(hidden, rows)
    if g is not None:
        rows_k, width = rows // g, g * hidden
        x2 = x.reshape(rows_k, width)
        if block_rows is None:
            block_rows = _pick_block_rows(rows_k, width, itemsize, budget, sub,
                                          num_tc)
        per_row = _per_row_bytes(width, itemsize)
        vmem_limit = _vmem_limit(per_row, block_rows, cap, extra=8 * width * g)

        # Constant segment matrices, built once and kept VMEM-resident
        # (index_map -> (0, 0) so Pallas never re-fetches them).
        narrow = jnp.repeat(jnp.eye(g, dtype=jnp.float32), hidden, axis=0)  # (width, g)
        expand = narrow.T                                                   # (g, width)

        out = pl.pallas_call(
            functools.partial(_norm_folded_kernel, eps=eps),
            out_shape=jax.ShapeDtypeStruct((rows_k, width), x.dtype),
            grid_spec=pltpu.PrefetchScalarGridSpec(
                num_scalar_prefetch=0,
                grid=(pl.cdiv(rows_k, block_rows),),
                in_specs=[pl.BlockSpec((block_rows, width), lambda i: (i, 0)),
                          pl.BlockSpec((width, g), lambda i: (0, 0)),
                          pl.BlockSpec((g, width), lambda i: (0, 0))],
                out_specs=pl.BlockSpec((block_rows, width), lambda i: (i, 0)),
            ),
            compiler_params=pltpu.CompilerParams(
                dimension_semantics=("parallel",),
                vmem_limit_bytes=vmem_limit),
        )(x2, narrow, expand)
        return out.reshape(orig_shape)

    # ---- Plain / wide paths -------------------------------------------------
    width = hidden
    x2 = x.reshape(rows, width)
    per_row = _per_row_bytes(width, itemsize)
    if block_width is not None or sub * per_row > budget:
        out = _norm_wide(x2, eps, rows, width, itemsize, sub, budget, cap,
                         num_tc, block_rows, block_width)
        return out.reshape(orig_shape)

    if block_rows is None:
        block_rows = _pick_block_rows(rows, width, itemsize, budget, sub, num_tc)
    vmem_limit = _vmem_limit(per_row, block_rows, cap)

    out = pl.pallas_call(
        functools.partial(_norm_kernel, eps=eps),
        out_shape=jax.ShapeDtypeStruct((rows, width), x.dtype),
        grid_spec=pltpu.PrefetchScalarGridSpec(
            num_scalar_prefetch=0,
            grid=(pl.cdiv(rows, block_rows),),
            in_specs=[pl.BlockSpec((block_rows, width), lambda i: (i, 0))],
            out_specs=pl.BlockSpec((block_rows, width), lambda i: (i, 0)),
        ),
        compiler_params=pltpu.CompilerParams(
            dimension_semantics=("parallel",),
            vmem_limit_bytes=vmem_limit),
    )(x2)
    return out.reshape(orig_shape)


def norm_ref(x, eps=1e-4):
    n = jnp.sqrt(jnp.sum(jnp.square(x.astype(jnp.float32)), axis=-1,
                         keepdims=True))
    return (x.astype(jnp.float32) / (n + eps)).astype(x.dtype)


if __name__ == "__main__":
    key = jax.random.PRNGKey(0)
    k1, k2, k3, k4, k5 = jax.random.split(key, 5)

    # Small (batch, seq, hidden) shapes consistent with the module's usage.
    x_fold32 = jax.random.normal(k1, (2, 8, 32), dtype=jnp.float32)    # folded, g=4
    x_fold48 = jax.random.normal(k2, (2, 8, 48), dtype=jnp.float32)    # folded, g=8 (48 does not divide 128)
    x_bf16 = jax.random.normal(k3, (2, 8, 64), dtype=jnp.bfloat16)     # folded, g=2, bf16 packing
    x_plain = jax.random.normal(k4, (2, 8, 128), dtype=jnp.float32)    # plain full-lane
    x_wtile = jax.random.normal(k5, (2, 8, 320), dtype=jnp.float32)    # forced two-pass width tiling

    y_fold32 = norm(x_fold32)
    y_fold48 = norm(x_fold48)
    y_bf16 = norm(x_bf16)
    y_plain = norm(x_plain)
    y_wtile = norm(x_wtile, block_width=128)
    jax.block_until_ready((y_fold32, y_fold48, y_bf16, y_plain, y_wtile))

    for xi, yi in ((x_fold32, y_fold32), (x_fold48, y_fold48),
                   (x_plain, y_plain), (x_wtile, y_wtile)):
        assert yi.shape == xi.shape and yi.dtype == xi.dtype
        assert jnp.allclose(yi, norm_ref(xi), atol=1e-5, rtol=1e-5)

    assert y_bf16.shape == x_bf16.shape and y_bf16.dtype == x_bf16.dtype
    assert jnp.allclose(y_bf16.astype(jnp.float32),
                        norm_ref(x_bf16).astype(jnp.float32),
                        atol=1e-2, rtol=1e-2)
    print("KERNEL_OK")
</pallas_src>

<mosaic_0001>
module attributes {stable_mosaic.version = 11 : i64} {
  func.func @_norm_folded_kernel(%arg0: i32, %arg1: memref<8x128xf32, #tpu.memory_space<vmem>>, %arg2: memref<128x4xf32, #tpu.memory_space<vmem>>, %arg3: memref<4x128xf32, #tpu.memory_space<vmem>>, %arg4: memref<8x128xf32, #tpu.memory_space<vmem>>) attributes {dimension_semantics = [#tpu.dimension_semantics<parallel>], iteration_bounds = array<i64: 1>, scalar_prefetch = 0 : i64, scratch_operands = 0 : i64, tpu.core_type = #tpu.core_type<tc>, window_params = [{transform_indices = @transform_0, window_bounds = array<i64: 8, 128>}, {pipeline_mode = #tpu.pipeline_mode<synchronous>, transform_indices = @transform_1, window_bounds = array<i64: 128, 4>}, {pipeline_mode = #tpu.pipeline_mode<synchronous>, transform_indices = @transform_2, window_bounds = array<i64: 4, 128>}, {transform_indices = @transform_3, window_bounds = array<i64: 8, 128>}]} {
    %c0 = arith.constant 0 : index
    %c0_0 = arith.constant 0 : index
    %0 = vector.load %arg1[%c0, %c0_0] : memref<8x128xf32, #tpu.memory_space<vmem>>, vector<8x128xf32>
    %1 = arith.mulf %0, %0 : vector<8x128xf32>
    %c0_1 = arith.constant 0 : index
    %c0_2 = arith.constant 0 : index
    %2 = vector.load %arg2[%c0_1, %c0_2] : memref<128x4xf32, #tpu.memory_space<vmem>>, vector<128x4xf32>
    %cst = arith.constant dense<0.000000e+00> : vector<8x4xf32>
    %3 = tpu.matmul %1, %2, %cst {dimension_numbers = #tpu.dot_dimension_numbers<[1], [0], [0], [1], [0, 0, 1, 1], [], []>} : vector<8x128xf32>, vector<128x4xf32>, vector<8x4xf32> -> vector<8x4xf32>
    %4 = math.sqrt %3 : vector<8x4xf32>
    %cst_3 = arith.constant 9.99999974E-5 : f32
    %5 = vector.broadcast %cst_3 : f32 to vector<8x4xf32>
    %6 = arith.addf %4, %5 : vector<8x4xf32>
    %7 = tpu.reciprocal %6 : vector<8x4xf32> -> vector<8x4xf32>
    %c0_4 = arith.constant 0 : index
    %c0_5 = arith.constant 0 : index
    %8 = vector.load %arg3[%c0_4, %c0_5] : memref<4x128xf32, #tpu.memory_space<vmem>>, vector<4x128xf32>
    %cst_6 = arith.constant dense<0.000000e+00> : vector<8x128xf32>
    %9 = tpu.matmul %7, %8, %cst_6 {dimension_numbers = #tpu.dot_dimension_numbers<[1], [0], [0], [1], [0, 0, 1, 1], [], []>} : vector<8x4xf32>, vector<4x128xf32>, vector<8x128xf32> -> vector<8x128xf32>
    %10 = arith.mulf %0, %9 : vector<8x128xf32>
    %c0_7 = arith.constant 0 : index
    %c0_8 = arith.constant 0 : index
    %11 = vector.load %arg4[%c0_7, %c0_8] : memref<8x128xf32, #tpu.memory_space<vmem>>, vector<8x128xf32>
    tpu.vector_store %arg4[%c0_7, %c0_8], %10 {strides = array<i32>} : memref<8x128xf32, #tpu.memory_space<vmem>>, vector<8x128xf32>,
    return
  }
  func.func @transform_0(%arg0: i32) -> (i32, i32) {
    %c0_i32 = arith.constant 0 : i32
    %c0_i32_0 = arith.constant 0 : i32
    return %arg0, %c0_i32 : i32, i32
  }
  func.func @transform_1(%arg0: i32) -> (i32, i32) {
    %c0_i32 = arith.constant 0 : i32
    %c0_i32_0 = arith.constant 0 : i32
    %c0_i32_1 = arith.constant 0 : i32
    return %c0_i32, %c0_i32_0 : i32, i32
  }
  func.func @transform_2(%arg0: i32) -> (i32, i32) {
    %c0_i32 = arith.constant 0 : i32
    %c0_i32_0 = arith.constant 0 : i32
    %c0_i32_1 = arith.constant 0 : i32
    return %c0_i32, %c0_i32_0 : i32, i32
  }
  func.func @transform_3(%arg0: i32) -> (i32, i32) {
    %c0_i32 = arith.constant 0 : i32
    %c0_i32_0 = arith.constant 0 : i32
    return %arg0, %c0_i32 : i32, i32
  }
}

</mosaic_0001>

<llo_original>
// kernel: tpu_custom_call.1
$region0: #{tpu_custom_call.1}
  #allocation0 [shape = 'u32[]', space=smem, size = 0x4, offset = 0x4, fixed_abs, tag = 'smem constant byte address 0x4 - core index']
  #allocation1 [shape = 'u32[144,128]{1,0:T(1,128)}', space=vmem, size = 0x12000, scoped, tag = 'internal scratch']
  %s0 = inlined_call_operand.vmem [shape: f32[4,128], index: 0, kind: input, shape index: {}]
  %s1 = inlined_call_operand.vmem [shape: f32[128,4], index: 1, kind: input, shape index: {}]
  %s2 = inlined_call_operand.vmem [shape: f32[4,128], index: 2, kind: input, shape index: {}]
  %s3 = inlined_call_operand.hbm [shape: f32[4,128], index: 3, kind: output, shape index: {}]
  %s4 = sld [smem:[#allocation0]]
  $region22: #{tpu_custom_call.1} parent=0
    _
  %s6 = ssub.s32 1, %s4
  %s7 = scalar_select 0, %s6, %s4
  $region1: #{tpu_custom_call.1} parent=0
    #allocation2 [shape = 'u8[4096]{0}', space=vmem, size = 0x1000, scoped, tag = 'output window, operand 0, single buffered']
    #allocation3 [shape = 's32[1]{0}', space=sflag, size = 0x4, scoped, tag = 'scoped memory for tpu_custom_call.1']
    %8 = vsyncpa [#allocation3], 0
    // Predicated region
    $region2: #{tpu_custom_call.1} parent=1 // pred_check
      _
    $region3: #{tpu_custom_call.1} parent=1 // pred_check_branch
      %10 = sbr.rel (0) target = $region5
    $region4: #{tpu_custom_call.1} parent=1 // pred_region
      _
    $region5: #{tpu_custom_call.1} parent=1 // pred_fallthru
      _
    // Predicated region
    $region6: #{tpu_custom_call.1} parent=1 // pred_check
      _
    $region7: #{tpu_custom_call.1} parent=1 // pred_check_branch
      %12 = sbr.rel (0) target = $region9
    $region8: #{tpu_custom_call.1} parent=1 // pred_region
      _
    $region9: #{tpu_custom_call.1} parent=1 // pred_fallthru
      _
    // Predicated region
    $region10: #{tpu_custom_call.1} parent=1 // pred_check
      _
    $region11: #{tpu_custom_call.1} parent=1 // pred_check_branch
      %14 = sbr.rel (0) target = $region13
    $region12: #{tpu_custom_call.1} parent=1 // pred_region
      _
    $region13: #{tpu_custom_call.1} parent=1 // pred_fallthru
      _
    %v15 = vld [vmem:[%s0] sm:$0xff]
    %v16 = vmul.f32 %v15, %v15
    %v17 = vld [vmem:[%s1] sm:$0xff]
    %v18 = vld [vmem:[%s1 + $0x8] sm:$0xff]
    %v19 = vld [vmem:[%s1 + $0x10] sm:$0xff]
    %v20 = vld [vmem:[%s1 + $0x18] sm:$0xff]
    %v21 = vld [vmem:[%s1 + $0x20] sm:$0xff]
    %v22 = vld [vmem:[%s1 + $0x28] sm:$0xff]
    %v23 = vld [vmem:[%s1 + $0x30] sm:$0xff]
    %v24 = vld [vmem:[%s1 + $0x38] sm:$0xff]
    %v25 = vld [vmem:[%s1 + $0x40] sm:$0xff]
    %v26 = vld [vmem:[%s1 + $0x48] sm:$0xff]
    %v27 = vld [vmem:[%s1 + $0x50] sm:$0xff]
    %v28 = vld [vmem:[%s1 + $0x58] sm:$0xff]
    %v29 = vld [vmem:[%s1 + $0x60] sm:$0xff]
    %v30 = vld [vmem:[%s1 + $0x68] sm:$0xff]
    %v31 = vld [vmem:[%s1 + $0x70] sm:$0xff]
    %v32 = vld [vmem:[%s1 + $0x78] sm:$0xff]
    %33 = vmatprep.subr.mxu0 0.0
    %34 = vmatpush1.msra.mxu0 %v17
    %35 = vmatprep.subr.mxu0 0.0
    %36 = vmatpush1.msra.mxu0 %v18
    %37 = vmatprep.subr.mxu0 0.0
    %38 = vmatpush1.msra.mxu0 %v19
    %39 = vmatprep.subr.mxu0 0.0
    %40 = vmatpush1.msra.mxu0 %v20
    %41 = vmatprep.subr.mxu0 0.0
    %42 = vmatpush1.msra.mxu0 %v21
    %43 = vmatprep.subr.mxu0 0.0
    %44 = vmatpush1.msra.mxu0 %v22
    %45 = vmatprep.subr.mxu0 0.0
    %46 = vmatpush1.msra.mxu0 %v23
    %47 = vmatprep.subr.mxu0 0.0
    %48 = vmatpush1.msra.mxu0 %v24
    %49 = vmatprep.subr.mxu0 0.0
    %50 = vmatpush1.msra.mxu0 %v25
    %51 = vmatprep.subr.mxu0 0.0
    %52 = vmatpush1.msra.mxu0 %v26
    %53 = vmatprep.subr.mxu0 0.0
    %54 = vmatpush1.msra.mxu0 %v27
    %55 = vmatprep.subr.mxu0 0.0
    %56 = vmatpush1.msra.mxu0 %v28
    %57 = vmatprep.subr.mxu0 0.0
    %58 = vmatpush1.msra.mxu0 %v29
    %59 = vmatprep.subr.mxu0 0.0
    %60 = vmatpush1.msra.mxu0 %v30
    %61 = vmatprep.subr.mxu0 0.0
    %62 = vmatpush1.msra.mxu0 %v31
    %63 = vmatprep.subr.mxu0 0.0
    %64 = vmatpush1.msra.mxu0 %v32
    %65 = vmatprep.subr.mxu0 0.0
    %66 = vmatpush1.msra.mxu0 0.0
    %67 = vmatprep.subr.mxu0 0.0
    %68 = vmatpush1.msra.mxu0 0.0
    %69 = vmatprep.subr.mxu0 0.0
    %70 = vmatpush1.msra.mxu0 0.0
    %71 = vmatprep.subr.mxu0 0.0
    %72 = vmatpush1.msra.mxu0 0.0
    %73 = vmatprep.subr.mxu0 0.0
    %74 = vmatpush1.msra.mxu0 0.0
    %75 = vmatprep.subr.mxu0 0.0
    %76 = vmatpush1.msra.mxu0 0.0
    %77 = vmatprep.subr.mxu0 0.0
    %78 = vmatpush1.msra.mxu0 0.0
    %79 = vmatprep.subr.mxu0 0.0
    %80 = vmatpush1.msra.mxu0 0.0
    %81 = vmatprep.subr.mxu0 0.0
    %82 = vmatpush1.msra.mxu0 0.0
    %83 = vmatprep.subr.mxu0 0.0
    %84 = vmatpush1.msra.mxu0 0.0
    %85 = vmatprep.subr.mxu0 0.0
    %86 = vmatpush1.msra.mxu0 0.0
    %87 = vmatprep.subr.mxu0 0.0
    %88 = vmatpush1.msra.mxu0 0.0
    %89 = vmatprep.subr.mxu0 0.0
    %90 = vmatpush1.msra.mxu0 0.0
    %91 = vmatprep.subr.mxu0 0.0
    %92 = vmatpush1.msra.mxu0 0.0
    %93 = vmatprep.subr.mxu0 0.0
    %94 = vmatpush1.msra.mxu0 0.0
    %95 = vmatprep.subr.mxu0 0.0
    %96 = vmatpush1.msra.mxu0 0.0
    %97 = vmatprep.mubr.f32.mxu0 0.0
    %98 = vmatmul.mubr.f32.gmra.mrb[0].mxu0 %v16
    %v99 = vpop.f32.mrb[0].mxu0
    %v100 = vadd.f32 0.0, %v99
    %v101 = vpop.f32.mrb[0].mxu0
    %102 = vdwg.mxu0
    %v103 = vrsqrt.pop %v100
    %v104 = vmul.f32 %v100, %v103
    %vm105 = vcmp.eq.f32.partialorder %v100, inf
    %v106 = vsel %vm105, %v100, %v104
    %vm107 = vcmp.eq.f32.partialorder %v100, 0.0
    %v108 = vand.u32 %v100, 2147483648
    %v109 = vsel %vm107, %v108, %v106
    %v110 = vadd.f32 %v109, 0.0001
    %v111 = vrcp.pop %v110
    %v112 = vld [vmem:[%s2] sm:$0xf]
    %vm113 = vcmask 31744
    %v115 = vsel %vm113, %v111, 0
    %vm117 = vcmask 1043456
    %v119 = vsel %vm117, %v112, 0
    %121 = vmatprep.subr.mxu0 0.0
    %122 = vmatpush1.msra.mxu0 %v119
    %123 = vmatprep.subr.mxu0 0.0
    %124 = vmatpush1.msra.mxu0 0.0
    %125 = vmatprep.subr.mxu0 0.0
    %126 = vmatpush1.msra.mxu0 0.0
    %127 = vmatprep.subr.mxu0 0.0
    %128 = vmatpush1.msra.mxu0 0.0
    %129 = vmatprep.subr.mxu0 0.0
    %130 = vmatpush1.msra.mxu0 0.0
    %131 = vmatprep.subr.mxu0 0.0
    %132 = vmatpush1.msra.mxu0 0.0
    %133 = vmatprep.subr.mxu0 0.0
    %134 = vmatpush1.msra.mxu0 0.0
    %135 = vmatprep.subr.mxu0 0.0
    %136 = vmatpush1.msra.mxu0 0.0
    %137 = vmatprep.subr.mxu0 0.0
    %138 = vmatpush1.msra.mxu0 0.0
    %139 = vmatprep.subr.mxu0 0.0
    %140 = vmatpush1.msra.mxu0 0.0
    %141 = vmatprep.subr.mxu0 0.0
    %142 = vmatpush1.msra.mxu0 0.0
    %143 = vmatprep.subr.mxu0 0.0
    %144 = vmatpush1.msra.mxu0 0.0
    %145 = vmatprep.subr.mxu0 0.0
    %146 = vmatpush1.msra.mxu0 0.0
    %147 = vmatprep.subr.mxu0 0.0
    %148 = vmatpush1.msra.mxu0 0.0
    %149 = vmatprep.subr.mxu0 0.0
    %150 = vmatpush1.msra.mxu0 0.0
    %151 = vmatprep.subr.mxu0 0.0
    %152 = vmatpush1.msra.mxu0 0.0
    %153 = vmatprep.subr.mxu0 0.0
    %154 = vmatpush1.msra.mxu0 0.0
    %155 = vmatprep.subr.mxu0 0.0
    %156 = vmatpush1.msra.mxu0 0.0
    %157 = vmatprep.subr.mxu0 0.0
    %158 = vmatpush1.msra.mxu0 0.0
    %159 = vmatprep.subr.mxu0 0.0
    %160 = vmatpush1.msra.mxu0 0.0
    %161 = vmatprep.subr.mxu0 0.0
    %162 = vmatpush1.msra.mxu0 0.0
    %163 = vmatprep.subr.mxu0 0.0
    %164 = vmatpush1.msra.mxu0 0.0
    %165 = vmatprep.subr.mxu0 0.0
    %166 = vmatpush1.msra.mxu0 0.0
    %167 = vmatprep.subr.mxu0 0.0
    %168 = vmatpush1.msra.mxu0 0.0
    %169 = vmatprep.subr.mxu0 0.0
    %170 = vmatpush1.msra.mxu0 0.0
    %171 = vmatprep.subr.mxu0 0.0
    %172 = vmatpush1.msra.mxu0 0.0
    %173 = vmatprep.subr.mxu0 0.0
    %174 = vmatpush1.msra.mxu0 0.0
    %175 = vmatprep.subr.mxu0 0.0
    %176 = vmatpush1.msra.mxu0 0.0
    %177 = vmatprep.subr.mxu0 0.0
    %178 = vmatpush1.msra.mxu0 0.0
    %179 = vmatprep.subr.mxu0 0.0
    %180 = vmatpush1.msra.mxu0 0.0
    %181 = vmatprep.subr.mxu0 0.0
    %182 = vmatpush1.msra.mxu0 0.0
    %183 = vmatprep.subr.mxu0 0.0
    %184 = vmatpush1.msra.mxu0 0.0
    %185 = vmatprep.mubr.f32.mxu0 0.0
    %186 = vmatmul.mubr.f32.gmra.mrb[0].mxu0 %v115
    %v187 = vpop.f32.mrb[0].mxu0
    %v188 = vadd.f32 0.0, %v187
    %v189 = vpop.f32.mrb[0].mxu0
    %190 = vdwg.mxu0
    %v191 = vmul.f32 %v15, %v188
    %192 = vst [vmem:[#allocation2] sm:$0xff] %v191
    // Predicated region
    $region14: #{tpu_custom_call.1} parent=1 // pred_check
      _
    $region15: #{tpu_custom_call.1} parent=1 // pred_check_branch
      %194 = sbr.rel (0) target = $region17
    $region16: #{tpu_custom_call.1} parent=1 // pred_region
      %s196 = ssub.s32 128, 64
      %197 = vsyncadd [#allocation3], %s196
      %s198 = sshll.u32 [#allocation2], 4
      %s199 = int_to_ptr.vmem [resolvable:$true] %s198
      %204 = dma.vmem_to_hbm [thread:$0]  %s199, 64, %s3, [#allocation3], 64, 64, 4
    $region17: #{tpu_custom_call.1} parent=1 // pred_fallthru
      _
    // Predicated region
    $region18: #{tpu_custom_call.1} parent=1 // pred_check
      _
    $region19: #{tpu_custom_call.1} parent=1 // pred_check_branch
      %206 = sbr.rel (0) target = $region21
    $region20: #{tpu_custom_call.1} parent=1 // pred_region
      %207 = dma.done [#allocation3], 128
    $region21: #{tpu_custom_call.1} parent=1 // pred_fallthru
      _
    %208 = vsyncpa [#allocation3], 1

</llo_original>
